<compile_context>
chip_gen: v7x
topology: tpu7x:2x2x1
jax: 0.10.0
libtpu: 0.0.40
codegen_flags: <defaults>
</compile_context>

<pallas_src>
import functools

import jax
import jax.numpy as jnp
import numpy as np
from jax.experimental import pallas as pl
from jax.experimental.pallas import tpu as pltpu

_PAD_LOGIT = -100.0  # only used on the fallback (non-pow2 C / rows % k != 0) path


def _round_up(x, m):
    return (x + m - 1) // m * m


def _default_num_cores():
    """2 TensorCores per chip on megacore parts (v4/v5p/v7x), else 1."""
    try:
        kind = jax.devices()[0].device_kind.lower()
    except Exception:
        return 1
    if ("lite" in kind) or ("v5e" in kind) or ("v6" in kind):
        return 1
    if ("v4" in kind) or ("v5p" in kind) or ("v5" in kind) or ("v7" in kind):
        return 2
    return 1


def _focal_loss_kernel(x_ref, t_ref, out_ref, acc_ref, *,
                       alpha, gamma, cp_sub, k, rows_valid, use_lane_map):
    c = pl.program_id(0)                  # core (parallel axis)
    i = pl.program_id(1)                  # step (reduction axis)
    steps = pl.num_programs(1)
    tm = x_ref.shape[0]

    @pl.when(i == 0)
    def _():
        acc_ref[...] = jnp.zeros_like(acc_ref)

    x = x_ref[...].astype(jnp.float32)                       # (tm, lanes)
    shape = x.shape
    lane_ids = jax.lax.broadcasted_iota(jnp.int32, shape, 1)

    # ---- positive-class mask t (one compare on the lane-map path) -----------
    if use_lane_map:
        lane_class = lane_ids & (cp_sub - 1)                 # cp_sub is pow2 here
        is_pos = lane_class == t_ref[...].astype(jnp.int32)  # int8 map, -1 = none
    else:
        is_pos = lane_ids == t_ref[:, 0:1]                   # k <= 2: tiny loop
        for s in range(1, k):
            is_pos = jnp.logical_or(is_pos, lane_ids == t_ref[:, s:s + 1])

    # ---- focal loss, folded algebra -----------------------------------------
    # One shared EUP exp feeds both the stable BCE log1p term and sigmoid.
    e = jnp.exp(-jnp.abs(x))
    log1pe = jnp.log1p(e)
    r = pl.reciprocal(1.0 + e, approx=False)                 # 1 / (1 + e), EUP

    neg_xs = jnp.where(is_pos, -x, x)                        # -logit of p_t
    ce = jnp.maximum(neg_xs, 0.0) + log1pe                   # -log(p_t), stable
    u = jnp.where(neg_xs >= 0.0, r, e * r)                   # 1 - p_t = sigmoid(neg_xs)
    if gamma == 2.0:
        mod = u * u                                          # no float pow
    elif gamma == 1.0:
        mod = u
    else:
        mod = u ** gamma
    loss = ce * mod
    if alpha >= 0:
        loss = loss * jnp.where(is_pos, alpha, 1.0 - alpha)

    # ---- exact-zero mask for rows past the real packed-row count ------------
    # Handles the partial trailing block and clamped duplicate blocks, and also
    # neutralizes any NaN/Inf garbage in the unspecified out-of-bounds rows.
    limit = rows_valid - (c * steps + i) * tm                # scalar (may be <= 0)
    valid = jax.lax.broadcasted_iota(jnp.int32, shape, 0) < limit
    acc_ref[...] += jnp.where(valid, loss, 0.0)              # pure VPU per step

    @pl.when(i == steps - 1)
    def _():
        # Single cross-lane reduction per core, broadcast into a lane-dense
        # (8,128) output block; partials are summed on the host side.
        out_ref[...] = jnp.broadcast_to(jnp.sum(acc_ref[...]), out_ref.shape)


def sigmoid_focal_loss_pallas(logits, target_classes, num_boxes,
                              alpha=0.25, gamma=2.0,
                              num_cores=None, tm_max=4096,
                              block_bytes=4 * 1024 * 1024):
    """logits: [..., C] float; target_classes: [...] int (value >= C = background)."""
    *lead, C = logits.shape
    rows = int(np.prod(lead)) if lead else 1

    if num_cores is None:
        num_cores = _default_num_cores()

    # --- lane packing geometry -------------------------------------------------
    if C <= 128:
        cp_sub = int(pl.next_power_of_2(C))      # padded classes per sub-row
        k = 128 // cp_sub                        # sub-rows folded per packed row
    else:
        cp_sub = _round_up(C, 128)
        k = 1
    lanes = k * cp_sub                           # 128 when C <= 128
    use_lane_map = k >= 4                        # per review: int8 map for k>=4

    # --- pack logits (free reshape on the common path; pad only as fallback) ---
    x2 = logits.reshape(rows, C)
    tc = target_classes.reshape(rows).astype(jnp.int32)
    rows_k = _round_up(rows, k)
    if (cp_sub != C) or (rows_k != rows):
        # Fallback only: non-pow2 C (class pad) and/or rows not a multiple of k.
        # Padded logits = -100 with no target lane -> exactly zero loss (underflow).
        x2 = jnp.pad(x2, ((0, rows_k - rows), (0, cp_sub - C)),
                     constant_values=_PAD_LOGIT)
        if rows_k != rows:
            tc = jnp.pad(tc, (0, rows_k - rows), constant_values=C)
    rows_packed = rows_k // k
    x = x2.reshape(rows_packed, lanes)

    # --- target representation --------------------------------------------------
    if use_lane_map:
        # Lane-dense int8 map: class of the sub-row broadcast across its cp_sub
        # lanes, -1 for background (+1 B/elem DMA, kills the k-iteration loop).
        cls8 = jnp.where((tc >= 0) & (tc < C), tc, -1).astype(jnp.int8)
        tgt = jnp.broadcast_to(cls8[:, None], (rows_k, cp_sub)).reshape(rows_packed, lanes)
        t_last = lanes
    else:
        # Tiny (rows_packed, k) int32 absolute-target-lane array; -1 = none.
        sub_off = (jnp.arange(rows_k, dtype=jnp.int32) % k) * cp_sub
        tgt = jnp.where((tc >= 0) & (tc < C), sub_off + tc, -1).reshape(rows_packed, k)
        t_last = k

    # --- row tiling: large lane-dense blocks, row mask handles the remainder ----
    itemsize = jnp.dtype(logits.dtype).itemsize
    sub_align = {4: 8, 2: 16, 1: 32}.get(itemsize, 8)
    row_align = max(sub_align, 32 if use_lane_map else 8)   # int8 map tiles at 32
    tm = min(tm_max, block_bytes // (lanes * itemsize))
    tm = max(row_align, tm // row_align * row_align)
    tm = min(tm, _round_up(pl.cdiv(rows_packed, num_cores), row_align))
    if rows_packed < tm:
        tm = rows_packed                                      # full-extent block
    blocks_raw = pl.cdiv(rows_packed, tm)
    steps = pl.cdiv(blocks_raw, num_cores)
    last_block = blocks_raw - 1

    # Clamp out-of-range logical blocks onto the last real block; their
    # contribution is zeroed by the in-kernel row mask.
    def blk_map(c, i):
        return (jnp.minimum(c * steps + i, last_block), 0)

    kernel = functools.partial(
        _focal_loss_kernel, alpha=float(alpha), gamma=float(gamma),
        cp_sub=cp_sub, k=k, rows_valid=rows_packed, use_lane_map=use_lane_map)

    partials = pl.pallas_call(
        kernel,
        out_shape=jax.ShapeDtypeStruct((num_cores * 8, 128), jnp.float32),
        grid_spec=pltpu.PrefetchScalarGridSpec(
            num_scalar_prefetch=0,
            grid=(num_cores, steps),
            in_specs=[
                pl.BlockSpec((tm, lanes), blk_map),
                pl.BlockSpec((tm, t_last), blk_map),
            ],
            out_specs=pl.BlockSpec((8, 128), lambda c, i: (c, 0)),
            scratch_shapes=[pltpu.VMEM((tm, lanes), jnp.float32)],
        ),
        compiler_params=pltpu.CompilerParams(
            dimension_semantics=("parallel", "arbitrary")),
    )(x, tgt)

    # Each core's (8,128) block is a broadcast of its partial sum.
    total = jnp.sum(partials.reshape(num_cores, -1)[:, 0])
    return total / num_boxes


class FocalLabelLossPallas:
    """JAX/Pallas port of e2edet FocalLabelLoss (forward only)."""

    def __init__(self, num_classes, focal_alpha):
        self.num_classes = num_classes
        self.focal_alpha = focal_alpha
        self.target_classes = None
        self.src_logits = None

    def __call__(self, outputs, targets, indices, num_boxes):
        src_logits = outputs["pred_logits"]            # [B, Q, C]
        B, Q, C = src_logits.shape

        # TODO(synk): Hungarian-matching gather/scatter (data-dependent, tiny)
        # stays in plain JAX; only the dense focal-loss reduction is a kernel.
        batch_idx = jnp.concatenate(
            [jnp.full_like(src, i) for i, (src, _) in enumerate(indices)])
        src_idx = jnp.concatenate([src for src, _ in indices])
        target_classes_o = jnp.concatenate(
            [t["labels"][J] for t, (_, J) in zip(targets, indices)])
        self.target_classes = target_classes_o
        self.src_logits = src_logits[batch_idx, src_idx]

        target_classes = jnp.full((B, Q), self.num_classes, dtype=jnp.int32)
        target_classes = target_classes.at[batch_idx, src_idx].set(
            target_classes_o.astype(jnp.int32))

        # Background (== num_classes) never maps to a class lane in-kernel,
        # reproducing the onehot[:, :, :-1] trick of the reference.
        loss_ce = sigmoid_focal_loss_pallas(
            src_logits, target_classes, num_boxes,
            alpha=self.focal_alpha, gamma=2.0)
        return {"loss_ce": loss_ce}


def _reference_loss(logits, target_classes, num_boxes, alpha, gamma=2.0):
    B, Q, C = logits.shape
    t = (target_classes[..., None] ==
         jnp.arange(C, dtype=jnp.int32)).astype(jnp.float32)
    x = logits.astype(jnp.float32)
    p = jax.nn.sigmoid(x)
    ce = jnp.maximum(x, 0.0) - x * t + jnp.log1p(jnp.exp(-jnp.abs(x)))
    p_t = p * t + (1 - p) * (1 - t)
    loss = ce * (1 - p_t) ** gamma
    if alpha >= 0:
        loss = (alpha * t + (1 - alpha) * (1 - t)) * loss
    return jnp.sum(loss) / num_boxes


if __name__ == "__main__":
    key = jax.random.PRNGKey(0)

    # ---- test 1: end-to-end FocalLabelLoss (C=16, primary lane-packed path) ----
    B, Q, num_classes = 2, 128, 16
    focal_alpha = 0.25
    k_logits, k_lab0, k_lab1 = jax.random.split(key, 3)
    pred_logits = jax.random.normal(k_logits, (B, Q, num_classes), dtype=jnp.float32)

    targets = [
        {"labels": jax.random.randint(k_lab0, (3,), 0, num_classes)},
        {"labels": jax.random.randint(k_lab1, (2,), 0, num_classes)},
    ]
    indices = [
        (jnp.array([1, 5, 7], dtype=jnp.int32), jnp.array([0, 1, 2], dtype=jnp.int32)),
        (jnp.array([0, 10], dtype=jnp.int32), jnp.array([1, 0], dtype=jnp.int32)),
    ]
    num_boxes = 5.0

    loss_fn = FocalLabelLossPallas(num_classes, focal_alpha)
    losses = loss_fn({"pred_logits": pred_logits}, targets, indices, num_boxes)
    loss_ce = jax.block_until_ready(losses["loss_ce"])

    # rebuild target_classes exactly as the module does, for the JAX reference
    batch_idx = jnp.concatenate(
        [jnp.full_like(src, i) for i, (src, _) in enumerate(indices)])
    src_idx = jnp.concatenate([src for src, _ in indices])
    tgt_o = jnp.concatenate([t["labels"][J] for t, (_, J) in zip(targets, indices)])
    tcls = jnp.full((B, Q), num_classes, dtype=jnp.int32)
    tcls = tcls.at[batch_idx, src_idx].set(tgt_o.astype(jnp.int32))
    ref = _reference_loss(pred_logits, tcls, num_boxes, focal_alpha)
    np.testing.assert_allclose(np.asarray(loss_ce), np.asarray(ref),
                               rtol=2e-4, atol=1e-5)

    # ---- test 2: forced 2-core grid (exercises clamped duplicate block + mask) --
    out2 = sigmoid_focal_loss_pallas(pred_logits, tcls, num_boxes,
                                     alpha=focal_alpha, gamma=2.0, num_cores=2)
    np.testing.assert_allclose(np.asarray(jax.block_until_ready(out2)),
                               np.asarray(ref), rtol=2e-4, atol=1e-5)

    # ---- test 3: non-power-of-two C (class-pad fallback + k<=2 loop path) -------
    kx, kt = jax.random.split(jax.random.PRNGKey(1))
    B3, Q3, C3 = 2, 24, 40
    logits3 = jax.random.normal(kx, (B3, Q3, C3), dtype=jnp.float32)
    tcls3 = jax.random.randint(kt, (B3, Q3), 0, C3 + 1)        # C3 == background
    out3 = sigmoid_focal_loss_pallas(logits3, tcls3, num_boxes,
                                     alpha=focal_alpha, gamma=2.0)
    ref3 = _reference_loss(logits3, tcls3.astype(jnp.int32), num_boxes, focal_alpha)
    np.testing.assert_allclose(np.asarray(jax.block_until_ready(out3)),
                               np.asarray(ref3), rtol=2e-4, atol=1e-5)

    print("KERNEL_OK")
</pallas_src>

<mosaic_0001>
module attributes {stable_mosaic.version = 11 : i64} {
  func.func @_focal_loss_kernel(%arg0: i32, %arg1: i32, %arg2: memref<32x128xf32, #tpu.memory_space<vmem>>, %arg3: memref<32x128xi8, #tpu.memory_space<vmem>>, %arg4: memref<8x128xf32, #tpu.memory_space<vmem>>, %arg5: memref<32x128xf32, #tpu.memory_space<vmem>>) attributes {dimension_semantics = [#tpu.dimension_semantics<parallel>, #tpu.dimension_semantics<arbitrary>], iteration_bounds = array<i64: 1, 1>, scalar_prefetch = 0 : i64, scratch_operands = 1 : i64, tpu.core_type = #tpu.core_type<tc>, window_params = [{transform_indices = @transform_0, window_bounds = array<i64: 32, 128>}, {transform_indices = @transform_1, window_bounds = array<i64: 32, 128>}, {transform_indices = @transform_2, window_bounds = array<i64: 8, 128>}]} {
    %c0_i32 = arith.constant 0 : i32
    %0 = arith.cmpi eq, %arg1, %c0_i32 : i32
    %1 = arith.extui %0 : i1 to i32
    %c0_i32_0 = arith.constant 0 : i32
    %2 = arith.cmpi ne, %1, %c0_i32_0 : i32
    scf.if %2 {
      %cst_18 = arith.constant 0.000000e+00 : f32
      %49 = vector.broadcast %cst_18 : f32 to vector<32x128xf32>
      %c0_19 = arith.constant 0 : index
      %c0_20 = arith.constant 0 : index
      %50 = vector.load %arg5[%c0_19, %c0_20] : memref<32x128xf32, #tpu.memory_space<vmem>>, vector<32x128xf32>
      tpu.vector_store %arg5[%c0_19, %c0_20], %49 {strides = array<i32>} : memref<32x128xf32, #tpu.memory_space<vmem>>, vector<32x128xf32>,
    } else {
    }
    %c0 = arith.constant 0 : index
    %c0_1 = arith.constant 0 : index
    %3 = vector.load %arg2[%c0, %c0_1] : memref<32x128xf32, #tpu.memory_space<vmem>>, vector<32x128xf32>
    %4 = tpu.iota {dimensions = array<i32: 1>} : vector<32x128xi32>
    %c15_i32 = arith.constant 15 : i32
    %5 = vector.broadcast %c15_i32 : i32 to vector<32x128xi32>
    %6 = arith.andi %4, %5 : vector<32x128xi32>
    %c0_2 = arith.constant 0 : index
    %c0_3 = arith.constant 0 : index
    %7 = vector.load %arg3[%c0_2, %c0_3] : memref<32x128xi8, #tpu.memory_space<vmem>>, vector<32x128xi8>
    %8 = arith.extsi %7 : vector<32x128xi8> to vector<32x128xi32>
    %9 = arith.cmpi eq, %6, %8 : vector<32x128xi32>
    %10 = math.absf %3 : vector<32x128xf32>
    %cst = arith.constant 0.000000e+00 : f32
    %11 = vector.broadcast %cst : f32 to vector<32x128xf32>
    %12 = arith.subf %11, %10 : vector<32x128xf32>
    %13 = math.exp %12 : vector<32x128xf32>
    %14 = math.log1p %13 : vector<32x128xf32>
    %cst_4 = arith.constant 1.000000e+00 : f32
    %15 = vector.broadcast %cst_4 : f32 to vector<32x128xf32>
    %16 = arith.addf %15, %13 : vector<32x128xf32>
    %17 = tpu.reciprocal %16 : vector<32x128xf32> -> vector<32x128xf32>
    %cst_5 = arith.constant 0.000000e+00 : f32
    %18 = vector.broadcast %cst_5 : f32 to vector<32x128xf32>
    %19 = arith.subf %18, %3 : vector<32x128xf32>
    %20 = arith.select %9, %19, %3 : vector<32x128xi1>, vector<32x128xf32>
    %cst_6 = arith.constant 0.000000e+00 : f32
    %21 = vector.broadcast %cst_6 : f32 to vector<32x128xf32>
    %22 = arith.maximumf %20, %21 : vector<32x128xf32>
    %23 = arith.addf %22, %14 : vector<32x128xf32>
    %cst_7 = arith.constant 0.000000e+00 : f32
    %24 = vector.broadcast %cst_7 : f32 to vector<32x128xf32>
    %25 = arith.cmpf oge, %20, %24 : vector<32x128xf32>
    %26 = arith.mulf %13, %17 : vector<32x128xf32>
    %27 = arith.select %25, %17, %26 : vector<32x128xi1>, vector<32x128xf32>
    %28 = arith.mulf %27, %27 : vector<32x128xf32>
    %29 = arith.mulf %23, %28 : vector<32x128xf32>
    %cst_8 = arith.constant 2.500000e-01 : f32
    %cst_9 = arith.constant 7.500000e-01 : f32
    %30 = vector.broadcast %cst_8 : f32 to vector<32x128xf32>
    %31 = vector.broadcast %cst_9 : f32 to vector<32x128xf32>
    %32 = arith.select %9, %30, %31 : vector<32x128xi1>, vector<32x128xf32>
    %33 = arith.mulf %29, %32 : vector<32x128xf32>
    %c1_i32 = arith.constant 1 : i32
    %34 = arith.muli %arg0, %c1_i32 : i32
    %35 = arith.addi %34, %arg1 : i32
    %c32_i32 = arith.constant 32 : i32
    %36 = arith.muli %35, %c32_i32 : i32
    %c32_i32_10 = arith.constant 32 : i32
    %37 = arith.subi %c32_i32_10, %36 : i32
    %38 = tpu.iota {dimensions = array<i32: 0>} : vector<32x128xi32>
    %39 = vector.broadcast %37 : i32 to vector<32x128xi32>
    %40 = arith.cmpi slt, %38, %39 : vector<32x128xi32>
    %c0_11 = arith.constant 0 : index
    %c0_12 = arith.constant 0 : index
    %41 = vector.load %arg5[%c0_11, %c0_12] : memref<32x128xf32, #tpu.memory_space<vmem>>, vector<32x128xf32>
    %cst_13 = arith.constant 0.000000e+00 : f32
    %42 = vector.broadcast %cst_13 : f32 to vector<32x128xf32>
    %43 = arith.select %40, %33, %42 : vector<32x128xi1>, vector<32x128xf32>
    %44 = arith.addf %41, %43 : vector<32x128xf32>
    %c0_14 = arith.constant 0 : index
    %c0_15 = arith.constant 0 : index
    %45 = vector.load %arg5[%c0_14, %c0_15] : memref<32x128xf32, #tpu.memory_space<vmem>>, vector<32x128xf32>
    tpu.vector_store %arg5[%c0_14, %c0_15], %44 {strides = array<i32>} : memref<32x128xf32, #tpu.memory_space<vmem>>, vector<32x128xf32>,
    %c0_i32_16 = arith.constant 0 : i32
    %46 = arith.cmpi eq, %arg1, %c0_i32_16 : i32
    %47 = arith.extui %46 : i1 to i32
    %c0_i32_17 = arith.constant 0 : i32
    %48 = arith.cmpi ne, %47, %c0_i32_17 : i32
    scf.if %48 {
      %c0_18 = arith.constant 0 : index
      %c0_19 = arith.constant 0 : index
      %49 = vector.load %arg5[%c0_18, %c0_19] : memref<32x128xf32, #tpu.memory_space<vmem>>, vector<32x128xf32>
      %50 = vector.shape_cast %49 : vector<32x128xf32> to vector<1x32x128xf32>
      %cst_20 = arith.constant dense<0.000000e+00> : vector<1xf32>
      %51 = vector.multi_reduction <add>, %50, %cst_20 [1, 2] : vector<1x32x128xf32> to vector<1xf32>
      %52 = vector.shape_cast %51 : vector<1xf32> to vector<1x1x1xf32>
      %53 = vector.extract %52[0, 0, 0] : f32 from vector<1x1x1xf32>
      %54 = vector.broadcast %53 : f32 to vector<8x128xf32>
      %c0_21 = arith.constant 0 : index
      %c0_22 = arith.constant 0 : index
      %55 = vector.load %arg4[%c0_21, %c0_22] : memref<8x128xf32, #tpu.memory_space<vmem>>, vector<8x128xf32>
      tpu.vector_store %arg4[%c0_21, %c0_22], %54 {strides = array<i32>} : memref<8x128xf32, #tpu.memory_space<vmem>>, vector<8x128xf32>,
    } else {
    }
    return
  }
  func.func @transform_0(%arg0: i32, %arg1: i32) -> (i32, i32) {
    %c1_i32 = arith.constant 1 : i32
    %0 = arith.muli %arg0, %c1_i32 : i32
    %1 = arith.addi %0, %arg1 : i32
    %c0_i32 = arith.constant 0 : i32
    %2 = arith.minsi %1, %c0_i32 : i32
    %c0_i32_0 = arith.constant 0 : i32
    %c0_i32_1 = arith.constant 0 : i32
    return %2, %c0_i32_0 : i32, i32
  }
  func.func @transform_1(%arg0: i32, %arg1: i32) -> (i32, i32) {
    %c1_i32 = arith.constant 1 : i32
    %0 = arith.muli %arg0, %c1_i32 : i32
    %1 = arith.addi %0, %arg1 : i32
    %c0_i32 = arith.constant 0 : i32
    %2 = arith.minsi %1, %c0_i32 : i32
    %c0_i32_0 = arith.constant 0 : i32
    %c0_i32_1 = arith.constant 0 : i32
    return %2, %c0_i32_0 : i32, i32
  }
  func.func @transform_2(%arg0: i32, %arg1: i32) -> (i32, i32) {
    %c0_i32 = arith.constant 0 : i32
    %c0_i32_0 = arith.constant 0 : i32
    return %arg0, %c0_i32 : i32, i32
  }
}

</mosaic_0001>

<llo_original>
// kernel: tpu_custom_call.1
$region0: #{tpu_custom_call.1}
  #allocation0 [shape = 'u32[]', space=smem, size = 0x4, offset = 0x4, fixed_abs, tag = 'smem constant byte address 0x4 - core index']
  #allocation1 [shape = 'u32[144,128]{1,0:T(1,128)}', space=vmem, size = 0x12000, scoped, tag = 'internal scratch']
  #allocation2 [shape = 'f32[32,128]{1,0:T(8,128)}', space=vmem, size = 0x4000, scoped, tag = 'scratch operand']
  %s0 = inlined_call_operand.hbm [shape: f32[32,128], index: 0, kind: input, shape index: {}]
  %s1 = inlined_call_operand.hbm [shape: s8[32,128], index: 1, kind: input, shape index: {}]
  %s2 = inlined_call_operand.hbm [shape: f32[8,128], index: 2, kind: output, shape index: {}]
  %s3 = sld [smem:[#allocation0]]
  $region34: #{tpu_custom_call.1} parent=0
    _
  %s5 = ssub.s32 1, %s3
  %s6 = scalar_select 0, %s5, %s3
  $region1: #{tpu_custom_call.1} parent=0
    #allocation3 [shape = 'u8[16384]{0}', space=vmem, size = 0x4000, scoped, tag = 'input window, operand 0, single buffered']
    #allocation4 [shape = 's32[1]{0}', space=sflag, size = 0x4, scoped, tag = 'scoped memory for tpu_custom_call.1']
    #allocation5 [shape = 's32[1]{0}', space=sflag, size = 0x4, scoped, tag = 'scoped memory for tpu_custom_call.1']
    #allocation6 [shape = 'u8[4096]{0}', space=vmem, size = 0x1000, scoped, tag = 'input window, operand 1, single buffered']
    #allocation7 [shape = 's32[1]{0}', space=sflag, size = 0x4, scoped, tag = 'scoped memory for tpu_custom_call.1']
    #allocation8 [shape = 'u8[4096]{0}', space=vmem, size = 0x1000, scoped, tag = 'output window, operand 0, single buffered']
    %7 = vsyncpa [#allocation4], 0
    %8 = vsyncpa [#allocation7], 0
    %9 = vsyncpa [#allocation5], 0
    // Predicated region
    $region2: #{tpu_custom_call.1} parent=1 // pred_check
      _
    $region3: #{tpu_custom_call.1} parent=1 // pred_check_branch
      %11 = sbr.rel (0) target = $region5
    $region4: #{tpu_custom_call.1} parent=1 // pred_region
      %s12 = sadd.s32 0, 0
      %p13 = scmp.lt.s32.totalorder %s12, 0
      %s14 = scalar_select %p13, %s12, 0
      %s15 = smul.u32 4, %s14
      %s17 = ssub.s32 512, 512
      %18 = vsyncadd [#allocation4], %s17
      %s19 = smul.addr %s15, 128
      %s20 = scalar_lea.hbm %s0, %s19
      %s21 = sshll.u32 [#allocation3], 4
      %s22 = int_to_ptr.vmem [resolvable:$true] %s21
      %27 = dma.hbm_to_vmem [thread:$0]  %s20, 512, %s22, [#allocation4], 128, 128, 8
    $region5: #{tpu_custom_call.1} parent=1 // pred_fallthru
      _
    // Predicated region
    $region6: #{tpu_custom_call.1} parent=1 // pred_check
      _
    $region7: #{tpu_custom_call.1} parent=1 // pred_check_branch
      %29 = sbr.rel (0) target = $region9
    $region8: #{tpu_custom_call.1} parent=1 // pred_region
      %s30 = sadd.s32 0, 0
      %p31 = scmp.lt.s32.totalorder %s30, 0
      %s32 = scalar_select %p31, %s30, 0
      %s34 = ssub.s32 128, 128
      %35 = vsyncadd [#allocation7], %s34
      %s36 = smul.addr %s32, 128
      %s37 = scalar_lea.hbm %s1, %s36
      %s39 = sshll.u32 [#allocation6], 4
      %s40 = int_to_ptr.vmem [resolvable:$true] %s39
      %42 = dma.hbm_to_vmem [thread:$0]  %s37, 128, %s40, [#allocation7]
    $region9: #{tpu_custom_call.1} parent=1 // pred_fallthru
      _
    // Predicated region
    $region10: #{tpu_custom_call.1} parent=1 // pred_check
      _
    $region11: #{tpu_custom_call.1} parent=1 // pred_check_branch
      %44 = sbr.rel (0) target = $region13
    $region12: #{tpu_custom_call.1} parent=1 // pred_region
      %45 = dma.done [#allocation4], 512
    $region13: #{tpu_custom_call.1} parent=1 // pred_fallthru
      _
    // Predicated region
    $region14: #{tpu_custom_call.1} parent=1 // pred_check
      _
    $region15: #{tpu_custom_call.1} parent=1 // pred_check_branch
      %47 = sbr.rel (0) target = $region17
    $region16: #{tpu_custom_call.1} parent=1 // pred_region
      %48 = dma.done [#allocation7], 128
    $region17: #{tpu_custom_call.1} parent=1 // pred_fallthru
      _
    %s49 = sadd.s32 0, 0
    %p50 = scmp.lt.s32.totalorder %s49, 0
    %s51 = scalar_select %p50, %s49, 0
    %s52 = smul.u32 4, %s51
    %s53 = sadd.s32 0, 0
    %p54 = scmp.lt.s32.totalorder %s53, 0
    %s55 = scalar_select %p54, %s53, 0
    %p56 = scmp.eq.s32.totalorder 0, 0
    // Predicated region
    $region18: #{tpu_custom_call.1} parent=1 // pred_check
      %p57 = pneg %p56
    $region19: #{tpu_custom_call.1} parent=1 // pred_check_branch
      %59 = sbr.rel (%p57) target = $region21
    $region20: #{tpu_custom_call.1} parent=1 // pred_region
      %60 = vst [vmem:[#allocation2] sm:$0xff] 0.0
      %61 = vst [vmem:[#allocation2 + $0x8] sm:$0xff] 0.0
      %62 = vst [vmem:[#allocation2 + $0x10] sm:$0xff] 0.0
      %63 = vst [vmem:[#allocation2 + $0x18] sm:$0xff] 0.0
    $region21: #{tpu_custom_call.1} parent=1 // pred_fallthru
      _
    %v64 = vld [vmem:[#allocation3] sm:$0xff]
    %v65 = vld [vmem:[#allocation3 + $0x8] sm:$0xff]
    %v66 = vld [vmem:[#allocation3 + $0x10] sm:$0xff]
    %v67 = vld [vmem:[#allocation3 + $0x18] sm:$0xff]
    %v68 = vlaneseq
    %v69 = vand.u32 %v68, 127
    %v70 = vand.u32 %v69, 15
    %v71 = vld [vmem:[#allocation6] sm:$0xff]
    %v72 = vunpack.c.0.s8 %v71
    %v73 = vunpack.c.1.s8 %v71
    %v74 = vunpack.c.2.s8 %v71
    %v75 = vunpack.c.3.s8 %v71
    %vm76 = vcmp.eq.s32.totalorder %v70, %v72
    %vm77 = vcmp.eq.s32.totalorder %v70, %v73
    %vm78 = vcmp.eq.s32.totalorder %v70, %v74
    %vm79 = vcmp.eq.s32.totalorder %v70, %v75
    %v80 = vand.u32 2147483647, %v64
    %v81 = vand.u32 2147483647, %v65
    %v82 = vand.u32 2147483647, %v66
    %v83 = vand.u32 2147483647, %v67
    %v84 = vsub.f32 0.0, %v80
    %v85 = vsub.f32 0.0, %v81
    %v86 = vsub.f32 0.0, %v82
    %v87 = vsub.f32 0.0, %v83
    %v88 = vmul.f32 %v84, 1.442695
    %v89 = vpow.pop %v88
    %v90 = vmul.f32 %v85, 1.442695
    %v91 = vpow.pop %v90
    %v92 = vmul.f32 %v86, 1.442695
    %v93 = vpow.pop %v92
    %v94 = vmul.f32 %v87, 1.442695
    %v95 = vpow.pop %v94
    %v96 = vadd.f32 %v89, 1.0
    %v97 = vlog2.pop %v96
    %v98 = vmul.f32 %v97, 0.6931472
    %v99 = vmul.f32 -0.5, %v89
    %v100 = vadd.f32 %v99, 1.0
    %v101 = vmul.f32 %v100, %v89
    %v102 = vand.u32 2147483647, %v89
    %vm103 = vcmp.lt.f32.partialorder %v102, 0.0004427343
    %v104 = vsel %vm103, %v101, %v98
    %v105 = vadd.f32 %v91, 1.0
    %v106 = vlog2.pop %v105
    %v107 = vmul.f32 %v106, 0.6931472
    %v108 = vmul.f32 -0.5, %v91
    %v109 = vadd.f32 %v108, 1.0
    %v110 = vmul.f32 %v109, %v91
    %v111 = vand.u32 2147483647, %v91
    %vm112 = vcmp.lt.f32.partialorder %v111, 0.0004427343
    %v113 = vsel %vm112, %v110, %v107
    %v114 = vadd.f32 %v93, 1.0
    %v115 = vlog2.pop %v114
    %v116 = vmul.f32 %v115, 0.6931472
    %v117 = vmul.f32 -0.5, %v93
    %v118 = vadd.f32 %v117, 1.0
    %v119 = vmul.f32 %v118, %v93
    %v120 = vand.u32 2147483647, %v93
    %vm121 = vcmp.lt.f32.partialorder %v120, 0.0004427343
    %v122 = vsel %vm121, %v119, %v116
    %v123 = vadd.f32 %v95, 1.0
    %v124 = vlog2.pop %v123
    %v125 = vmul.f32 %v124, 0.6931472
    %v126 = vmul.f32 -0.5, %v95
    %v127 = vadd.f32 %v126, 1.0
    %v128 = vmul.f32 %v127, %v95
    %v129 = vand.u32 2147483647, %v95
    %vm130 = vcmp.lt.f32.partialorder %v129, 0.0004427343
    %v131 = vsel %vm130, %v128, %v125
    %v132 = vadd.f32 %v89, 1.0
    %v133 = vadd.f32 %v91, 1.0
    %v134 = vadd.f32 %v93, 1.0
    %v135 = vadd.f32 %v95, 1.0
    %v136 = vrcp.pop %v132
    %v137 = vrcp.pop %v133
    %v138 = vrcp.pop %v134
    %v139 = vrcp.pop %v135
    %v140 = vsub.f32 0.0, %v64
    %v141 = vsub.f32 0.0, %v65
    %v142 = vsub.f32 0.0, %v66
    %v143 = vsub.f32 0.0, %v67
    %v144 = vsel %vm76, %v140, %v64
    %v145 = vsel %vm77, %v141, %v65
    %v146 = vsel %vm78, %v142, %v66
    %v147 = vsel %vm79, %v143, %v67
    %v148 = vmax.f32 %v144, 0.0
    %v149 = vmax.f32 %v145, 0.0
    %v150 = vmax.f32 %v146, 0.0
    %v151 = vmax.f32 %v147, 0.0
    %v152 = vadd.f32 %v148, %v104
    %v153 = vadd.f32 %v149, %v113
    %v154 = vadd.f32 %v150, %v122
    %v155 = vadd.f32 %v151, %v131
    %vm156 = vcmp.ge.f32.partialorder %v144, 0.0
    %vm157 = vcmp.ge.f32.partialorder %v145, 0.0
    %vm158 = vcmp.ge.f32.partialorder %v146, 0.0
    %vm159 = vcmp.ge.f32.partialorder %v147, 0.0
    %v160 = vmul.f32 %v89, %v136
    %v161 = vmul.f32 %v91, %v137
    %v162 = vmul.f32 %v93, %v138
    %v163 = vmul.f32 %v95, %v139
    %v164 = vsel %vm156, %v136, %v160
    %v165 = vsel %vm157, %v137, %v161
    %v166 = vsel %vm158, %v138, %v162
    %v167 = vsel %vm159, %v139, %v163
    %v168 = vmul.f32 %v164, %v164
    %v169 = vmul.f32 %v165, %v165
    %v170 = vmul.f32 %v166, %v166
    %v171 = vmul.f32 %v167, %v167
    %v172 = vmul.f32 %v152, %v168
    %v173 = vmul.f32 %v153, %v169
    %v174 = vmul.f32 %v154, %v170
    %v175 = vmul.f32 %v155, %v171
    %v176 = vsel %vm76, 0.25, 0.75
    %v177 = vsel %vm77, 0.25, 0.75
    %v178 = vsel %vm78, 0.25, 0.75
    %v179 = vsel %vm79, 0.25, 0.75
    %v180 = vmul.f32 %v172, %v176
    %v181 = vmul.f32 %v173, %v177
    %v182 = vmul.f32 %v174, %v178
    %v183 = vmul.f32 %v175, %v179
    %s184 = sadd.s32 0, 0
    %s185 = smul.u32 %s184, 32
    %s186 = ssub.s32 32, %s185
    %v187 = vlaneseq
    %v188 = vshrl.u32 %v187, 7
    %v189 = vadd.s32 %v188, 8
    %v190 = vadd.s32 %v188, 16
    %v191 = vadd.s32 %v188, 24
    %v192 = vstv %s186
    %vm193 = vcmp.lt.s32.totalorder %v188, %v192
    %vm194 = vcmp.lt.s32.totalorder %v189, %v192
    %vm195 = vcmp.lt.s32.totalorder %v190, %v192
    %vm196 = vcmp.lt.s32.totalorder %v191, %v192
    %v197 = vld [vmem:[#allocation2] sm:$0xff]
    %v198 = vld [vmem:[#allocation2 + $0x8] sm:$0xff]
    %v199 = vld [vmem:[#allocation2 + $0x10] sm:$0xff]
    %v200 = vld [vmem:[#allocation2 + $0x18] sm:$0xff]
    %v201 = vsel %vm193, %v180, 0.0
    %v202 = vsel %vm194, %v181, 0.0
    %v203 = vsel %vm195, %v182, 0.0
    %v204 = vsel %vm196, %v183, 0.0
    %v205 = vadd.f32 %v197, %v201
    %v206 = vadd.f32 %v198, %v202
    %v207 = vadd.f32 %v199, %v203
    %v208 = vadd.f32 %v200, %v204
    %209 = vst [vmem:[#allocation2] sm:$0xff] %v205
    %210 = vst [vmem:[#allocation2 + $0x8] sm:$0xff] %v206
    %211 = vst [vmem:[#allocation2 + $0x10] sm:$0xff] %v207
    %212 = vst [vmem:[#allocation2 + $0x18] sm:$0xff] %v208
    // Predicated region
    $region22: #{tpu_custom_call.1} parent=1 // pred_check
      %p213 = pneg %p56
    $region23: #{tpu_custom_call.1} parent=1 // pred_check_branch
      %215 = sbr.rel (%p213) target = $region25
    $region24: #{tpu_custom_call.1} parent=1 // pred_region
      %v216 = vld [vmem:[#allocation2] sm:$0xff]
      %v217 = vld [vmem:[#allocation2 + $0x8] sm:$0xff]
      %v218 = vld [vmem:[#allocation2 + $0x10] sm:$0xff]
      %v219 = vld [vmem:[#allocation2 + $0x18] sm:$0xff]
      %v220 = vadd.f32 %v216, %v217
      %v221 = vadd.f32 %v220, %v218
      %v222 = vadd.f32 %v221, %v219
      %223 = vadd.xlane.f32.xlu0 %v222
      %v224 = vpop.xlane.xlu0 %223
      %v225 = vrot.slane %v224, 4
      %v226 = vadd.f32 %v224, %v225
      %v227 = vrot.slane %v226, 2
      %v228 = vadd.f32 %v226, %v227
      %v229 = vrot.slane %v228, 1
      %v230 = vadd.f32 %v228, %v229
      %s231 = vtos %v230
      %v232 = vstv %s231
      %233 = vst [vmem:[#allocation8] sm:$0xff] %v232
    $region25: #{tpu_custom_call.1} parent=1 // pred_fallthru
      _
    // Predicated region
    $region26: #{tpu_custom_call.1} parent=1 // pred_check
      _
    $region27: #{tpu_custom_call.1} parent=1 // pred_check_branch
      %235 = sbr.rel (0) target = $region29
    $region28: #{tpu_custom_call.1} parent=1 // pred_region
      %s237 = ssub.s32 128, 128
      %238 = vsyncadd [#allocation5], %s237
      %s240 = sshll.u32 [#allocation8], 4
      %s241 = int_to_ptr.vmem [resolvable:$true] %s240
      %243 = dma.vmem_to_hbm [thread:$0]  %s241, 128, %s2, [#allocation5]
    $region29: #{tpu_custom_call.1} parent=1 // pred_fallthru
      _
    // Predicated region
    $region30: #{tpu_custom_call.1} parent=1 // pred_check
      _
    $region31: #{tpu_custom_call.1} parent=1 // pred_check_branch
      %245 = sbr.rel (0) target = $region33
    $region32: #{tpu_custom_call.1} parent=1 // pred_region
      %246 = dma.done [#allocation5], 128
    $region33: #{tpu_custom_call.1} parent=1 // pred_fallthru
      _
    %247 = vsyncpa [#allocation4], 1
    %248 = vsyncpa [#allocation7], 1
    %249 = vsyncpa [#allocation5], 1

</llo_original>
